<compile_context>
chip_gen: v6e
topology: v6e:2x2x1
jax: 0.10.0
libtpu: 0.0.40
codegen_flags: <defaults>
</compile_context>

<pallas_src>
import functools

import jax
import jax.numpy as jnp
from jax import lax
from jax.experimental import pallas as pl
from jax.experimental.pallas import tpu as pltpu


_NEG_BIAS = -1e30  # pad-lane bias: exp(-1e30 - max) == 0 exactly in f32


def _round_up(x, m):
    return ((x + m - 1) // m) * m


def _choose_tile(s, max_tile):
    """Largest legal seq tile: full dim if small, else a multiple-of-8 divisor."""
    if s <= max_tile:
        return s
    if s % 8:
        return s  # TODO(synk): non-multiple-of-8 seq lengths fall back to whole-seq blocks
    t = (max_tile // 8) * 8
    while t >= 8:
        if s % t == 0:
            return t
        t -= 8
    return s


def _softmax_last(v):
    m = jnp.max(v, axis=-1, keepdims=True)
    p = jnp.exp(v - m)
    s = jnp.sum(p, axis=-1, keepdims=True)
    return p * pl.reciprocal(s, approx=True)


def _linear_pt(x, w_ref, b_ref):
    # x: (N, In); w: (Out, In) [PyTorch nn.Linear layout] -> contract In vs In.
    y = lax.dot_general(x, w_ref[...],
                        dimension_numbers=(((1,), (1,)), ((), ())),
                        preferred_element_type=jnp.float32)
    return y + b_ref[...]


# ---------------------------------------------------------------------------
# TaskRouter.forward — tiny, runs once (hoisted out of the token grid)
# ---------------------------------------------------------------------------
def _task_router_kernel(tp_ref, tw1_ref, tb1_ref, tw2_ref, tb2_ref, out_ref):
    tp = tp_ref[...]                                           # (B, D), input dtype
    h = jnp.maximum(_linear_pt(tp, tw1_ref, tb1_ref), 0.0)     # (B, R_pad) f32
    logits = _linear_pt(h.astype(tp.dtype), tw2_ref, tb2_ref)  # (B, E_pad) f32
    out_ref[...] = _softmax_last(logits)                       # pad lanes -> 0


# ---------------------------------------------------------------------------
# TokenRouter.forward — gridded over (batch, seq tiles)
# ---------------------------------------------------------------------------
def _token_router_kernel(hs_ref, task_ref, w1_ref, b1_ref, w2_ref, b2_ref,
                         alpha_ref, rw_ref, tok_ref, *, top_k, use_top_k):
    x = hs_ref[0]                                              # (TILE_S, D), input dtype

    # token router MLP: Linear(D,R)+ReLU+Linear(R,E), softmax over experts.
    h = jnp.maximum(_linear_pt(x, w1_ref, b1_ref), 0.0)        # (TILE_S, R_pad) f32
    logits = _linear_pt(h.astype(x.dtype), w2_ref, b2_ref)     # (TILE_S, E_pad) f32
    token_w = _softmax_last(logits)                            # pad lanes -> 0

    # blend with per-batch task weight: (1 - sigmoid(alpha)) * token + sigmoid(alpha) * task
    a = alpha_ref[0, 0]
    rw = (1.0 - a) * token_w + a * task_ref[0]                 # (TILE_S, E_pad)

    # top-k routing strategy: keep top_k, fill rest with finfo.min, re-softmax.
    if use_top_k:
        neg = jnp.finfo(jnp.float32).min
        e_pad = rw.shape[-1]
        lane = lax.broadcasted_iota(jnp.int32, rw.shape, 1)    # hoisted, single temp
        work = rw
        keep = jnp.zeros(rw.shape, dtype=jnp.bool_)
        for _ in range(top_k):                                 # static, top_k is small
            row_max = jnp.max(work, axis=-1, keepdims=True)
            cand = jnp.where(work == row_max, lane, e_pad)
            first = jnp.min(cand, axis=-1, keepdims=True)      # lowest index on ties
            sel = lane == first
            keep = jnp.logical_or(keep, sel)
            work = jnp.where(sel, neg, work)
        rw = _softmax_last(jnp.where(keep, rw, neg))

    rw_ref[0] = rw.astype(rw_ref.dtype)
    tok_ref[0] = token_w.astype(tok_ref.dtype)


# ---------------------------------------------------------------------------
# Wrapper
# ---------------------------------------------------------------------------
def token_router_forward(hidden_states, task_presentation, params,
                         *, top_k=2, use_top_k=True, max_tile_s=256):
    """hidden_states: (B, S, D); task_presentation: (B, D).

    Returns (routing_weight (B,S,E), token_routing_weight (B,S,E), task_weight (B,E)).
    """
    B, S, D = hidden_states.shape
    dtype = hidden_states.dtype
    itemsize = jnp.dtype(dtype).itemsize
    R = params["w1"].shape[0]
    E = params["w2"].shape[0]
    assert top_k <= E, "top_k must not exceed num_experts"

    # Lane-friendly padding: experts and router hidden dim to multiples of 128.
    E_pad = max(128, _round_up(E, 128))
    R_pad = max(128, _round_up(R, 128))

    def pad_w(w, out_pad, in_pad):
        o, i = w.shape
        return jnp.pad(w.astype(dtype), ((0, out_pad - o), (0, in_pad - i)))

    def pad_b(b, n_pad, fill):
        n = b.shape[0]
        return jnp.pad(b.astype(jnp.float32), (0, n_pad - n),
                       constant_values=fill).reshape(1, n_pad)

    # Weights in input dtype (bf16-native MXU when activations are bf16); biases f32.
    w1 = pad_w(params["w1"], R_pad, D)
    b1 = pad_b(params["b1"], R_pad, 0.0)
    w2 = pad_w(params["w2"], E_pad, R_pad)
    b2 = pad_b(params["b2"], E_pad, _NEG_BIAS)     # pad experts -> -inf logits
    tw1 = pad_w(params["tw1"], R_pad, D)
    tb1 = pad_b(params["tb1"], R_pad, 0.0)
    tw2 = pad_w(params["tw2"], E_pad, R_pad)
    tb2 = pad_b(params["tb2"], E_pad, _NEG_BIAS)

    vmem = pl.BlockSpec(memory_space=pltpu.MemorySpace.VMEM)
    smem = pl.BlockSpec(memory_space=pltpu.MemorySpace.SMEM)

    # --- TaskRouter.forward: computed exactly once -------------------------
    task_w_pad = pl.pallas_call(
        _task_router_kernel,
        out_shape=jax.ShapeDtypeStruct((B, E_pad), jnp.float32),
        in_specs=[vmem] * 5,
        out_specs=vmem,
    )(task_presentation.astype(dtype), tw1, tb1, tw2, tb2)

    # --- TokenRouter main kernel, gridded over (batch, seq tiles) ----------
    TILE_S = _choose_tile(S, max_tile_s)
    grid = (B, S // TILE_S)

    alpha_sig = jax.nn.sigmoid(params["alpha"].astype(jnp.float32)).reshape(1, 1)
    task_in = task_w_pad.reshape(B, 1, E_pad)      # per-batch row, lane-dense

    hs_spec = pl.BlockSpec((1, TILE_S, D), lambda b, s: (b, s, 0))
    task_spec = pl.BlockSpec((1, 1, E_pad), lambda b, s: (b, 0, 0))
    out_spec = pl.BlockSpec((1, TILE_S, E_pad), lambda b, s: (b, s, 0))

    def resident(shape):  # weights/biases stay in VMEM across all grid steps
        return pl.BlockSpec(shape, lambda b, s: (0, 0))

    # Advisory cost + VMEM budget (double-buffered activation tile + resident weights).
    n_tok = B * S
    cost = pl.CostEstimate(
        flops=int(2 * n_tok * D * R_pad + 2 * n_tok * R_pad * E_pad),
        transcendentals=int(2 * n_tok * E_pad),
        bytes_accessed=int(n_tok * D * itemsize + 2 * n_tok * E_pad * itemsize
                           + (R_pad * D + E_pad * R_pad) * itemsize),
    )
    vmem_needed = (2 * TILE_S * D * itemsize                    # hs double buffer
                   + (R_pad * D + E_pad * R_pad) * itemsize     # resident weights
                   + 2 * 2 * TILE_S * E_pad * itemsize          # 2 outputs, 2 buffers
                   + 6 * TILE_S * max(R_pad, E_pad) * 4)        # f32 intermediates
    vmem_limit = min(64 * 1024 * 1024, max(2 * int(vmem_needed), 16 * 1024 * 1024))

    kernel = functools.partial(_token_router_kernel, top_k=top_k, use_top_k=use_top_k)
    rw_pad, tok_pad = pl.pallas_call(
        kernel,
        grid=grid,
        out_shape=(jax.ShapeDtypeStruct((B, S, E_pad), dtype),
                   jax.ShapeDtypeStruct((B, S, E_pad), dtype)),
        in_specs=[hs_spec, task_spec,
                  resident((R_pad, D)), resident((1, R_pad)),
                  resident((E_pad, R_pad)), resident((1, E_pad)),
                  smem],
        out_specs=(out_spec, out_spec),
        compiler_params=pltpu.CompilerParams(
            dimension_semantics=("parallel", "parallel"),
            vmem_limit_bytes=vmem_limit),
        cost_estimate=cost,
    )(hidden_states, task_in, w1, b1, w2, b2, alpha_sig)

    # Slice the lane-padding off in the wrapper (free layout plumbing).
    rw = rw_pad[..., :E]
    tok_w = tok_pad[..., :E]
    task_w = task_w_pad[:, :E].astype(dtype)
    return rw, tok_w, task_w


# ---------------------------------------------------------------------------
# Pure-JAX reference (mirrors the PyTorch module) for correctness checking
# ---------------------------------------------------------------------------
def token_router_reference(hidden_states, task_presentation, params,
                           *, top_k=2, use_top_k=True):
    a = jax.nn.sigmoid(params["alpha"])

    def mlp(x, w1, b1, w2, b2):
        h = jnp.maximum(x @ w1.T + b1, 0.0)
        return h @ w2.T + b2

    task_w = jax.nn.softmax(
        mlp(task_presentation, params["tw1"], params["tb1"],
            params["tw2"], params["tb2"]), axis=-1)
    tok_w = jax.nn.softmax(
        mlp(hidden_states, params["w1"], params["b1"],
            params["w2"], params["b2"]), axis=-1)
    rw = (1.0 - a) * tok_w + a * task_w[:, None, :]
    if use_top_k:
        E = rw.shape[-1]
        _, idx = lax.top_k(rw, top_k)
        keep = jax.nn.one_hot(idx, E).sum(axis=-2) > 0
        rw = jax.nn.softmax(jnp.where(keep, rw, jnp.finfo(rw.dtype).min), axis=-1)
    return rw, tok_w, task_w


# ---------------------------------------------------------------------------
# Deterministic synthetic parameters (matches module __init__ shapes)
# ---------------------------------------------------------------------------
def init_params(key, input_dim, router_hidden_dim, num_experts,
                *, layer_id=8, max_llm_layer=16, epsilon_alpha=2.0,
                alpha_shift=0.0):
    ks = jax.random.split(key, 4)
    alpha = jnp.float32(-epsilon_alpha
                        + 2.0 * epsilon_alpha * (layer_id / max_llm_layer)
                        + alpha_shift)
    return {
        "alpha": alpha,
        # token router MLP (num_router_mlp_layers=2): Linear(D,R)+ReLU+Linear(R,E)
        "w1": 0.05 * jax.random.normal(ks[0], (router_hidden_dim, input_dim), jnp.float32),
        "b1": jnp.zeros((router_hidden_dim,), jnp.float32),
        "w2": 0.05 * jax.random.normal(ks[1], (num_experts, router_hidden_dim), jnp.float32),
        "b2": jnp.zeros((num_experts,), jnp.float32),
        # task router MLP: Linear(hidden,R)+ReLU+Linear(R,E)
        "tw1": 0.05 * jax.random.normal(ks[2], (router_hidden_dim, input_dim), jnp.float32),
        "tb1": jnp.zeros((router_hidden_dim,), jnp.float32),
        "tw2": 0.05 * jax.random.normal(ks[3], (num_experts, router_hidden_dim), jnp.float32),
        "tb2": jnp.zeros((num_experts,), jnp.float32),
    }


if __name__ == "__main__":
    B, S, D = 2, 8, 32          # batch, seq, hidden_size / input_dim
    R, E, TOP_K = 16, 8, 2      # router_hidden_dim, num_experts, top_k

    key = jax.random.PRNGKey(0)
    k_hs, k_tp, k_par = jax.random.split(key, 3)

    hidden_states = jax.random.normal(k_hs, (B, S, D), jnp.float32)
    task_presentation = jax.random.normal(k_tp, (B, D), jnp.float32)
    params = init_params(k_par, D, R, E)

    rw, tok_w, task_w = token_router_forward(
        hidden_states, task_presentation, params, top_k=TOP_K, use_top_k=True)
    rw = jax.block_until_ready(rw)
    tok_w = jax.block_until_ready(tok_w)
    task_w = jax.block_until_ready(task_w)

    assert rw.shape == (B, S, E), rw.shape
    assert tok_w.shape == (B, S, E), tok_w.shape
    assert task_w.shape == (B, E), task_w.shape
    assert bool(jnp.all(jnp.isfinite(rw)))
    assert bool(jnp.all(jnp.isfinite(tok_w)))
    assert bool(jnp.all(jnp.isfinite(task_w)))
    # routing weights form a valid top-k-sparse distribution
    assert bool(jnp.allclose(rw.sum(-1), 1.0, atol=1e-2))
    assert bool(jnp.all((rw > 0).sum(-1) == TOP_K))
    assert bool(jnp.allclose(tok_w.sum(-1), 1.0, atol=1e-2))

    # compare against the pure-JAX reference of the PyTorch module
    rw_ref, tok_ref, task_ref = token_router_reference(
        hidden_states, task_presentation, params, top_k=TOP_K, use_top_k=True)
    assert bool(jnp.allclose(rw, rw_ref, atol=3e-3)), float(jnp.abs(rw - rw_ref).max())
    assert bool(jnp.allclose(tok_w, tok_ref, atol=3e-3))
    assert bool(jnp.allclose(task_w, task_ref, atol=3e-3))

    print("KERNEL_OK")
</pallas_src>

<mosaic_0001>
module attributes {stable_mosaic.version = 11 : i64} {
  func.func @_task_router_kernel(%arg0: memref<2x32xf32, #tpu.memory_space<vmem>>, %arg1: memref<128x32xf32, #tpu.memory_space<vmem>>, %arg2: memref<1x128xf32, #tpu.memory_space<vmem>>, %arg3: memref<128x128xf32, #tpu.memory_space<vmem>>, %arg4: memref<1x128xf32, #tpu.memory_space<vmem>>, %arg5: memref<2x128xf32, #tpu.memory_space<vmem>>) attributes {dimension_semantics = [], scalar_prefetch = 0 : i64, scratch_operands = 0 : i64, tpu.core_type = #tpu.core_type<tc>} {
    %c0 = arith.constant 0 : index
    %c0_0 = arith.constant 0 : index
    %0 = vector.load %arg0[%c0, %c0_0] : memref<2x32xf32, #tpu.memory_space<vmem>>, vector<2x32xf32>
    %c0_1 = arith.constant 0 : index
    %c0_2 = arith.constant 0 : index
    %1 = vector.load %arg1[%c0_1, %c0_2] : memref<128x32xf32, #tpu.memory_space<vmem>>, vector<128x32xf32>
    %cst = arith.constant dense<0.000000e+00> : vector<2x128xf32>
    %2 = tpu.matmul %0, %1, %cst {dimension_numbers = #tpu.dot_dimension_numbers<[1], [1], [0], [0], [0, 0, 1, 0], [], []>} : vector<2x32xf32>, vector<128x32xf32>, vector<2x128xf32> -> vector<2x128xf32>
    %c0_3 = arith.constant 0 : index
    %c0_4 = arith.constant 0 : index
    %3 = vector.load %arg2[%c0_3, %c0_4] : memref<1x128xf32, #tpu.memory_space<vmem>>, vector<1x128xf32>
    %4 = vector.broadcast %3 : vector<1x128xf32> to vector<2x128xf32>
    %5 = arith.addf %2, %4 : vector<2x128xf32>
    %cst_5 = arith.constant 0.000000e+00 : f32
    %6 = vector.broadcast %cst_5 : f32 to vector<2x128xf32>
    %7 = arith.maximumf %5, %6 : vector<2x128xf32>
    %c0_6 = arith.constant 0 : index
    %c0_7 = arith.constant 0 : index
    %8 = vector.load %arg3[%c0_6, %c0_7] : memref<128x128xf32, #tpu.memory_space<vmem>>, vector<128x128xf32>
    %cst_8 = arith.constant dense<0.000000e+00> : vector<2x128xf32>
    %9 = tpu.matmul %7, %8, %cst_8 {dimension_numbers = #tpu.dot_dimension_numbers<[1], [1], [0], [0], [0, 0, 1, 0], [], []>} : vector<2x128xf32>, vector<128x128xf32>, vector<2x128xf32> -> vector<2x128xf32>
    %c0_9 = arith.constant 0 : index
    %c0_10 = arith.constant 0 : index
    %10 = vector.load %arg4[%c0_9, %c0_10] : memref<1x128xf32, #tpu.memory_space<vmem>>, vector<1x128xf32>
    %11 = vector.broadcast %10 : vector<1x128xf32> to vector<2x128xf32>
    %12 = arith.addf %9, %11 : vector<2x128xf32>
    %cst_11 = arith.constant dense<0xFF800000> : vector<2xf32>
    %13 = vector.multi_reduction <maximumf>, %12, %cst_11 [1] : vector<2x128xf32> to vector<2xf32>
    %14 = vector.shape_cast %13 : vector<2xf32> to vector<2x1xf32>
    %15 = vector.broadcast %14 : vector<2x1xf32> to vector<2x128xf32>
    %16 = arith.subf %12, %15 : vector<2x128xf32>
    %17 = math.exp %16 : vector<2x128xf32>
    %cst_12 = arith.constant dense<0.000000e+00> : vector<2xf32>
    %18 = vector.multi_reduction <add>, %17, %cst_12 [1] : vector<2x128xf32> to vector<2xf32>
    %19 = vector.shape_cast %18 : vector<2xf32> to vector<2x1xf32>
    %20 = tpu.reciprocal %19 {approx = true} : vector<2x1xf32> -> vector<2x1xf32>
    %21 = vector.broadcast %20 : vector<2x1xf32> to vector<2x128xf32>
    %22 = arith.mulf %17, %21 : vector<2x128xf32>
    %c0_13 = arith.constant 0 : index
    %c0_14 = arith.constant 0 : index
    %23 = vector.load %arg5[%c0_13, %c0_14] : memref<2x128xf32, #tpu.memory_space<vmem>>, vector<2x128xf32>
    tpu.vector_store %arg5[%c0_13, %c0_14], %22 {strides = array<i32>} : memref<2x128xf32, #tpu.memory_space<vmem>>, vector<2x128xf32>,
    return
  }
}

</mosaic_0001>

<llo_original>
// kernel: tpu_custom_call.1
$region0: #{tpu_custom_call.1}
  #allocation0 [shape = 'u32[]', space=smem, size = 0x4, offset = 0x4, fixed_abs, tag = 'smem constant byte address 0x4 - core index']
  #allocation1 [shape = 'u32[144,128]{1,0:T(1,128)}', space=vmem, size = 0x12000, scoped, tag = 'internal scratch']
  %s0 = inlined_call_operand.vmem [shape: f32[2,32], index: 0, kind: input, shape index: {}]
  %s1 = inlined_call_operand.vmem [shape: f32[128,32], index: 1, kind: input, shape index: {}]
  %s2 = inlined_call_operand.vmem [shape: f32[1,128], index: 2, kind: input, shape index: {}]
  %s3 = inlined_call_operand.vmem [shape: f32[128,128], index: 3, kind: input, shape index: {}]
  %s4 = inlined_call_operand.vmem [shape: f32[1,128], index: 4, kind: input, shape index: {}]
  %s5 = inlined_call_operand.hbm [shape: f32[2,128], index: 5, kind: output, shape index: {}]
  %s6 = sld [smem:[#allocation0]]
  $region30: #{tpu_custom_call.1} parent=0
    _
  %s8 = ssub.s32 1, %s6
  %s9 = scalar_select 0, %s8, %s6
  $region1: #{tpu_custom_call.1} parent=0
    #allocation2 [shape = 'u8[1024]{0}', space=vmem, size = 0x400, scoped, tag = 'output window, operand 0, single buffered']
    #allocation3 [shape = 's32[1]{0}', space=sflag, size = 0x4, scoped, tag = 'scoped memory for tpu_custom_call.1']
    %10 = vsyncpa [#allocation3], 0
    // Predicated region
    $region2: #{tpu_custom_call.1} parent=1 // pred_check
      _
    $region3: #{tpu_custom_call.1} parent=1 // pred_check_branch
      %12 = sbr.rel (0) target = $region5
    $region4: #{tpu_custom_call.1} parent=1 // pred_region
      _
    $region5: #{tpu_custom_call.1} parent=1 // pred_fallthru
      _
    // Predicated region
    $region6: #{tpu_custom_call.1} parent=1 // pred_check
      _
    $region7: #{tpu_custom_call.1} parent=1 // pred_check_branch
      %14 = sbr.rel (0) target = $region9
    $region8: #{tpu_custom_call.1} parent=1 // pred_region
      _
    $region9: #{tpu_custom_call.1} parent=1 // pred_fallthru
      _
    // Predicated region
    $region10: #{tpu_custom_call.1} parent=1 // pred_check
      _
    $region11: #{tpu_custom_call.1} parent=1 // pred_check_branch
      %16 = sbr.rel (0) target = $region13
    $region12: #{tpu_custom_call.1} parent=1 // pred_region
      _
    $region13: #{tpu_custom_call.1} parent=1 // pred_fallthru
      _
    // Predicated region
    $region14: #{tpu_custom_call.1} parent=1 // pred_check
      _
    $region15: #{tpu_custom_call.1} parent=1 // pred_check_branch
      %18 = sbr.rel (0) target = $region17
    $region16: #{tpu_custom_call.1} parent=1 // pred_region
      _
    $region17: #{tpu_custom_call.1} parent=1 // pred_fallthru
      _
    // Predicated region
    $region18: #{tpu_custom_call.1} parent=1 // pred_check
      _
    $region19: #{tpu_custom_call.1} parent=1 // pred_check_branch
      %20 = sbr.rel (0) target = $region21
    $region20: #{tpu_custom_call.1} parent=1 // pred_region
      _
    $region21: #{tpu_custom_call.1} parent=1 // pred_fallthru
      _
    %v21 = vld [vmem:[%s0] sm:$0x3]
    %v22 = vld [vmem:[%s1] sm:$0xff]
    %v23 = vld [vmem:[%s1 + $0x8] sm:$0xff]
    %v24 = vld [vmem:[%s1 + $0x10] sm:$0xff]
    %v25 = vld [vmem:[%s1 + $0x18] sm:$0xff]
    %v26 = vld [vmem:[%s1 + $0x20] sm:$0xff]
    %v27 = vld [vmem:[%s1 + $0x28] sm:$0xff]
    %v28 = vld [vmem:[%s1 + $0x30] sm:$0xff]
    %v29 = vld [vmem:[%s1 + $0x38] sm:$0xff]
    %v30 = vld [vmem:[%s1 + $0x40] sm:$0xff]
    %v31 = vld [vmem:[%s1 + $0x48] sm:$0xff]
    %v32 = vld [vmem:[%s1 + $0x50] sm:$0xff]
    %v33 = vld [vmem:[%s1 + $0x58] sm:$0xff]
    %v34 = vld [vmem:[%s1 + $0x60] sm:$0xff]
    %v35 = vld [vmem:[%s1 + $0x68] sm:$0xff]
    %v36 = vld [vmem:[%s1 + $0x70] sm:$0xff]
    %v37 = vld [vmem:[%s1 + $0x78] sm:$0xff]
    %v38 = vld [vmem:[%s2] sm:$0x1]
    %v40 = vlaneseq
    %v41 = vshrl.u32 %v40, 7
    %v42 = vsub.s32 0, %v41
    %v43 = vrot.slane %v38, %v42
    %vm45 = vcmask 261120
    %v47 = vsel %vm45, %v21, 0
    %v50 = vsel %vm45, %v22, 0
    %v53 = vsel %vm45, %v23, 0
    %v56 = vsel %vm45, %v24, 0
    %v59 = vsel %vm45, %v25, 0
    %v62 = vsel %vm45, %v26, 0
    %v65 = vsel %vm45, %v27, 0
    %v68 = vsel %vm45, %v28, 0
    %v71 = vsel %vm45, %v29, 0
    %v74 = vsel %vm45, %v30, 0
    %v77 = vsel %vm45, %v31, 0
    %v80 = vsel %vm45, %v32, 0
    %v83 = vsel %vm45, %v33, 0
    %v86 = vsel %vm45, %v34, 0
    %v89 = vsel %vm45, %v35, 0
    %v92 = vsel %vm45, %v36, 0
    %v95 = vsel %vm45, %v37, 0
    %97 = vmatprep.subr.mxu0 0.0
    %98 = vmatpush1.xpose.msra.mxu0 %v95
    %99 = vmatprep.subr.mxu0 0.0
    %100 = vmatpush1.xpose.msra.mxu0 %v92
    %101 = vmatprep.subr.mxu0 0.0
    %102 = vmatpush1.xpose.msra.mxu0 %v89
    %103 = vmatprep.subr.mxu0 0.0
    %104 = vmatpush1.xpose.msra.mxu0 %v86
    %105 = vmatprep.subr.mxu0 0.0
    %106 = vmatpush1.xpose.msra.mxu0 %v83
    %107 = vmatprep.subr.mxu0 0.0
    %108 = vmatpush1.xpose.msra.mxu0 %v80
    %109 = vmatprep.subr.mxu0 0.0
    %110 = vmatpush1.xpose.msra.mxu0 %v77
    %111 = vmatprep.subr.mxu0 0.0
    %112 = vmatpush1.xpose.msra.mxu0 %v74
    %113 = vmatprep.subr.mxu0 0.0
    %114 = vmatpush1.xpose.msra.mxu0 %v71
    %115 = vmatprep.subr.mxu0 0.0
    %116 = vmatpush1.xpose.msra.mxu0 %v68
    %117 = vmatprep.subr.mxu0 0.0
    %118 = vmatpush1.xpose.msra.mxu0 %v65
    %119 = vmatprep.subr.mxu0 0.0
    %120 = vmatpush1.xpose.msra.mxu0 %v62
    %121 = vmatprep.subr.mxu0 0.0
    %122 = vmatpush1.xpose.msra.mxu0 %v59
    %123 = vmatprep.subr.mxu0 0.0
    %124 = vmatpush1.xpose.msra.mxu0 %v56
    %125 = vmatprep.subr.mxu0 0.0
    %126 = vmatpush1.xpose.msra.mxu0 %v53
    %127 = vmatprep.subr.mxu0 0.0
    %128 = vmatpush1.xpose.msra.mxu0 %v50
    %129 = vmatprep.subr.mxu0 0.0
    %130 = vmatpush2.xpose.msra.mxu0 0.0
    %131 = vmatprep.subr.mxu0 0.0
    %132 = vmatpush2.xpose.msra.mxu0 0.0
    %133 = vmatprep.subr.mxu0 0.0
    %134 = vmatpush2.xpose.msra.mxu0 0.0
    %135 = vmatprep.subr.mxu0 0.0
    %136 = vmatpush2.xpose.msra.mxu0 0.0
    %137 = vmatprep.subr.mxu0 0.0
    %138 = vmatpush2.xpose.msra.mxu0 0.0
    %139 = vmatprep.subr.mxu0 0.0
    %140 = vmatpush2.xpose.msra.mxu0 0.0
    %141 = vmatprep.subr.mxu0 0.0
    %142 = vmatpush2.xpose.msra.mxu0 0.0
    %143 = vmatprep.subr.mxu0 0.0
    %144 = vmatpush2.xpose.msra.mxu0 0.0
    %145 = vmatprep.subr.mxu0 0.0
    %146 = vmatpush2.xpose.msra.mxu0 0.0
    %147 = vmatprep.subr.mxu0 0.0
    %148 = vmatpush2.xpose.msra.mxu0 0.0
    %149 = vmatprep.subr.mxu0 0.0
    %150 = vmatpush2.xpose.msra.mxu0 0.0
    %151 = vmatprep.subr.mxu0 0.0
    %152 = vmatpush2.xpose.msra.mxu0 0.0
    %153 = vmatprep.subr.mxu0 0.0
    %154 = vmatpush2.xpose.msra.mxu0 0.0
    %155 = vmatprep.subr.mxu0 0.0
    %156 = vmatpush2.xpose.msra.mxu0 0.0
    %157 = vmatprep.subr.mxu0 0.0
    %158 = vmatpush2.xpose.msra.mxu0 0.0
    %159 = vmatprep.subr.mxu0 0.0
    %160 = vmatpush2.xpose.msra.mxu0 0.0
    %161 = vmatprep.mubr.f32.mxu0 0.0
    %162 = vmatmul.mubr.f32.gmra.mxu0 %v47
    %v163 = vpop.f32.mrf.mxu0
    %v164 = vadd.f32 %v43, %v163
    %v165 = vpop.f32.mrf.mxu0
    %166 = vdwg.mxu0
    %v167 = vmax.f32 %v164, 0.0
    %v168 = vld [vmem:[%s3] sm:$0xff]
    %v169 = vld [vmem:[%s3 + $0x8] sm:$0xff]
    %v170 = vld [vmem:[%s3 + $0x10] sm:$0xff]
    %v171 = vld [vmem:[%s3 + $0x18] sm:$0xff]
    %v172 = vld [vmem:[%s3 + $0x20] sm:$0xff]
    %v173 = vld [vmem:[%s3 + $0x28] sm:$0xff]
    %v174 = vld [vmem:[%s3 + $0x30] sm:$0xff]
    %v175 = vld [vmem:[%s3 + $0x38] sm:$0xff]
    %v176 = vld [vmem:[%s3 + $0x40] sm:$0xff]
    %v177 = vld [vmem:[%s3 + $0x48] sm:$0xff]
    %v178 = vld [vmem:[%s3 + $0x50] sm:$0xff]
    %v179 = vld [vmem:[%s3 + $0x58] sm:$0xff]
    %v180 = vld [vmem:[%s3 + $0x60] sm:$0xff]
    %v181 = vld [vmem:[%s3 + $0x68] sm:$0xff]
    %v182 = vld [vmem:[%s3 + $0x70] sm:$0xff]
    %v183 = vld [vmem:[%s3 + $0x78] sm:$0xff]
    %v184 = vld [vmem:[%s4] sm:$0x1]
    %v186 = vlaneseq
    %v187 = vshrl.u32 %v186, 7
    %v188 = vsub.s32 0, %v187
    %v189 = vrot.slane %v184, %v188
    %191 = vmatprep.subr.mxu0 0.0
    %192 = vmatpush1.xpose.msra.mxu0 %v183
    %193 = vmatprep.subr.mxu0 0.0
    %194 = vmatpush1.xpose.msra.mxu0 %v182
    %195 = vmatprep.subr.mxu0 0.0
    %196 = vmatpush1.xpose.msra.mxu0 %v181
    %197 = vmatprep.subr.mxu0 0.0
    %198 = vmatpush1.xpose.msra.mxu0 %v180
    %199 = vmatprep.subr.mxu0 0.0
    %200 = vmatpush1.xpose.msra.mxu0 %v179
    %201 = vmatprep.subr.mxu0 0.0
    %202 = vmatpush1.xpose.msra.mxu0 %v178
    %203 = vmatprep.subr.mxu0 0.0
    %204 = vmatpush1.xpose.msra.mxu0 %v177
    %205 = vmatprep.subr.mxu0 0.0
    %206 = vmatpush1.xpose.msra.mxu0 %v176
    %207 = vmatprep.subr.mxu0 0.0
    %208 = vmatpush1.xpose.msra.mxu0 %v175
    %209 = vmatprep.subr.mxu0 0.0
    %210 = vmatpush1.xpose.msra.mxu0 %v174
    %211 = vmatprep.subr.mxu0 0.0
    %212 = vmatpush1.xpose.msra.mxu0 %v173
    %213 = vmatprep.subr.mxu0 0.0
    %214 = vmatpush1.xpose.msra.mxu0 %v172
    %215 = vmatprep.subr.mxu0 0.0
    %216 = vmatpush1.xpose.msra.mxu0 %v171
    %217 = vmatprep.subr.mxu0 0.0
    %218 = vmatpush1.xpose.msra.mxu0 %v170
    %219 = vmatprep.subr.mxu0 0.0
    %220 = vmatpush1.xpose.msra.mxu0 %v169
    %221 = vmatprep.subr.mxu0 0.0
    %222 = vmatpush1.xpose.msra.mxu0 %v168
    %223 = vmatprep.subr.mxu0 0.0
    %224 = vmatpush2.xpose.msra.mxu0 0.0
    %225 = vmatprep.subr.mxu0 0.0
    %226 = vmatpush2.xpose.msra.mxu0 0.0
    %227 = vmatprep.subr.mxu0 0.0
    %228 = vmatpush2.xpose.msra.mxu0 0.0
    %229 = vmatprep.subr.mxu0 0.0
    %230 = vmatpush2.xpose.msra.mxu0 0.0
    %231 = vmatprep.subr.mxu0 0.0
    %232 = vmatpush2.xpose.msra.mxu0 0.0
    %233 = vmatprep.subr.mxu0 0.0
    %234 = vmatpush2.xpose.msra.mxu0 0.0
    %235 = vmatprep.subr.mxu0 0.0
    %236 = vmatpush2.xpose.msra.mxu0 0.0
    %237 = vmatprep.subr.mxu0 0.0
    %238 = vmatpush2.xpose.msra.mxu0 0.0
    %239 = vmatprep.subr.mxu0 0.0
    %240 = vmatpush2.xpose.msra.mxu0 0.0
    %241 = vmatprep.subr.mxu0 0.0
    %242 = vmatpush2.xpose.msra.mxu0 0.0
    %243 = vmatprep.subr.mxu0 0.0
    %244 = vmatpush2.xpose.msra.mxu0 0.0
    %245 = vmatprep.subr.mxu0 0.0
    %246 = vmatpush2.xpose.msra.mxu0 0.0
    %247 = vmatprep.subr.mxu0 0.0
    %248 = vmatpush2.xpose.msra.mxu0 0.0
    %249 = vmatprep.subr.mxu0 0.0
    %250 = vmatpush2.xpose.msra.mxu0 0.0
    %251 = vmatprep.subr.mxu0 0.0
    %252 = vmatpush2.xpose.msra.mxu0 0.0
    %253 = vmatprep.subr.mxu0 0.0
    %254 = vmatpush2.xpose.msra.mxu0 0.0
    %255 = vmatprep.mubr.f32.mxu0 0.0
    %256 = vmatmul.mubr.f32.gmra.mxu0 %v167
    %v257 = vpop.f32.mrf.mxu0
    %v258 = vadd.f32 %v189, %v257
    %v259 = vpop.f32.mrf.mxu0
    %260 = vdwg.mxu0
    %vm261 = vcmask 1041408
    %v262 = vsel %vm261, %v258, -inf
    %263 = vmax.xlane.f32.xlu0 %v262
    %v264 = vpop.xlane.xlu0 %263
    %v265 = vsub.f32 %v258, %v264
    %v266 = vmul.f32 %v265, 1.442695
    %v267 = vpow.pop %v266
    %v268 = vsel %vm261, %v267, 0.0
    %269 = vadd.xlane.f32.xlu0 %v268
    %v270 = vpop.xlane.xlu0 %269
    %v271 = vrcp.pop %v270
    %v272 = vmul.f32 %v267, %v271
    %273 = vst [vmem:[#allocation2] sm:$0x3] %v272
    // Predicated region
    $region22: #{tpu_custom_call.1} parent=1 // pred_check
      _
    $region23: #{tpu_custom_call.1} parent=1 // pred_check_branch
      %275 = sbr.rel (0) target = $region25
    $region24: #{tpu_custom_call.1} parent=1 // pred_region
      %s277 = ssub.s32 32, 32
      %278 = vsyncadd [#allocation3], %s277
      %s280 = sshll.u32 [#allocation2], 4
      %s281 = int_to_ptr.vmem [resolvable:$true] %s280
      %283 = dma.vmem_to_hbm [thread:$0]  %s281, 32, %s5, [#allocation3]
    $region25: #{tpu_custom_call.1} parent=1 // pred_fallthru
      _
    // Predicated region
    $region26: #{tpu_custom_call.1} parent=1 // pred_check
      _
    $region27: #{tpu_custom_call.1} parent=1 // pred_check_branch
      %285 = sbr.rel (0) target = $region29
    $region28: #{tpu_custom_call.1} parent=1 // pred_region
      %286 = dma.done [#allocation3], 32
    $region29: #{tpu_custom_call.1} parent=1 // pred_fallthru
      _
    %287 = vsyncpa [#allocation3], 1

</llo_original>
